<compile_context>
chip_gen: v7x
topology: tpu7x:2x2x1
jax: 0.10.0
libtpu: 0.0.40
codegen_flags: <defaults>
</compile_context>

<pallas_src>
import jax
import jax.numpy as jnp
from jax.experimental import pallas as pl
from jax.experimental.pallas import tpu as pltpu


def _round_up(x, m):
    return (x + m - 1) // m * m


def _pick_tm(batch):
    if batch >= 512:
        return 256
    if batch >= 64:
        return 128
    return _round_up(batch, 16)           # >= 16 rows (bf16 sublane pack)


def _pick_tk(in_dim, tm, fp, budget_bytes=12 * 1024 * 1024):
    """Largest K tile (<=2048, multiple of 128) whose double-buffered streamed
    operands (bf16 x-tile + bf16 W-tile) fit the VMEM budget."""
    tk = 2048
    while tk > 256 and 2 * 2 * tk * (tm + fp) > budget_bytes:
        tk //= 2
    return min(tk, _round_up(in_dim, 128))


def _cvc_kernel(x_ref, wf_ref, bf_ref, w2_ref, b2_ref, wc_ref, bc_ref,
                feat_ref, clus_ref, acc_ref):
    k = pl.program_id(1)

    @pl.when(k == 0)
    def _():
        acc_ref[...] = jnp.zeros_like(acc_ref)

    # ---- K-tiled (backbone folded into projector layer 1) matmul ----
    # bf16 operands, f32 accumulation on the MXU.
    acc_ref[...] += jnp.dot(x_ref[...], wf_ref[...],
                            preferred_element_type=jnp.float32)

    @pl.when(k == pl.num_programs(1) - 1)
    def _():
        # ---- instance_projector tail: (+bias) -> ReLU -> Linear ----
        h = jnp.maximum(acc_ref[...] + bf_ref[...], 0.0)
        feat = jnp.dot(h.astype(jnp.bfloat16), w2_ref[...],
                       preferred_element_type=jnp.float32) + b2_ref[...]
        feat_ref[...] = feat.astype(feat_ref.dtype)

        # ---- cluster_projector: Linear -> Softmax(dim=1) ----
        # Padded cluster columns carry a -1e30 bias -> exp() underflows to 0.
        logits = jnp.dot(feat.astype(jnp.bfloat16), wc_ref[...],
                         preferred_element_type=jnp.float32) + bc_ref[...]
        m = jnp.max(logits, axis=-1, keepdims=True)
        e = jnp.exp(logits - m)
        denom = jnp.sum(e, axis=-1, keepdims=True)
        clus_ref[...] = (e * pl.reciprocal(denom, approx=True)).astype(clus_ref.dtype)


def cvc_2d_forward(image, params, *, with_aug=False, image_aug=None):
    """Returns [feature, cluster_m, instance_aug_m] like the PyTorch module."""
    B0, C, H, W = image.shape
    in_dim = C * H * W

    feature_dim = params["w1"].shape[0]
    rep_dim = params["w2"].shape[1]
    cluster_num = params["wc"].shape[1]
    if rep_dim != feature_dim:
        # Same constraint as the reference forward (cluster_projector consumes
        # the instance_projector output of size representation_dim).
        raise ValueError("CVC_2d requires representation_dim == feature_dim "
                         f"(got {rep_dim} vs {feature_dim}).")

    # ---- fold the linear backbone stand-in into projector layer 1 ----
    # TODO(synk): real ViT backbone (vit_select) not provided; linear stand-in,
    # so Wbb @ W1 folding is exact here.
    w_fused = params["wbb"] @ params["w1"]                 # [in_dim, F]
    b_fused = params["bbb"] @ params["w1"] + params["b1"]  # [1, F]

    # ---- lane-dense padded shapes (multiples of 128) ----
    Fp = _round_up(feature_dim, 128)
    Rp = _round_up(rep_dim, 128)
    Cp = _round_up(cluster_num, 128)

    wf_bf16 = w_fused.astype(jnp.bfloat16)
    bf_pad = jnp.zeros((1, Fp), jnp.float32).at[:, :feature_dim].set(
        b_fused.astype(jnp.float32))
    w2_pad = jnp.zeros((Fp, Rp), jnp.bfloat16).at[:feature_dim, :rep_dim].set(
        params["w2"].astype(jnp.bfloat16))
    b2_pad = jnp.zeros((1, Rp), jnp.float32).at[:, :rep_dim].set(
        params["b2"].astype(jnp.float32))
    wc_pad = jnp.zeros((Rp, Cp), jnp.bfloat16).at[:feature_dim, :cluster_num].set(
        params["wc"].astype(jnp.bfloat16))
    # Padded cluster logits get a huge negative bias so softmax ignores them.
    bc_pad = jnp.full((1, Cp), -1e30, jnp.float32).at[:, :cluster_num].set(
        params["bc"].astype(jnp.float32))

    def run(x_flat):
        B = x_flat.shape[0]
        TM = _pick_tm(B)
        B_pad = _round_up(B, TM)
        TK = _pick_tk(in_dim, TM, Fp)
        in_dim_pad = _round_up(in_dim, TK)

        wf_pad = jnp.zeros((in_dim_pad, Fp), jnp.bfloat16)
        wf_pad = wf_pad.at[:in_dim, :feature_dim].set(wf_bf16)

        x_pad = jnp.zeros((B_pad, in_dim_pad), jnp.bfloat16)
        x_pad = x_pad.at[:B, :in_dim].set(x_flat.astype(jnp.bfloat16))

        n_m = B_pad // TM
        n_k = in_dim_pad // TK

        flops = 2 * B_pad * (in_dim_pad * Fp + Fp * Rp + Rp * Cp)
        transcendentals = B_pad * Cp
        bytes_accessed = (x_pad.size * 2 + n_m * wf_pad.size * 2 + w2_pad.size * 2 +
                          wc_pad.size * 2 +
                          (bf_pad.size + b2_pad.size + bc_pad.size) * 4 +
                          B_pad * (Rp + Cp) * 4)

        feat_pad, clus_pad = pl.pallas_call(
            _cvc_kernel,
            out_shape=(
                jax.ShapeDtypeStruct((B_pad, Rp), jnp.float32),
                jax.ShapeDtypeStruct((B_pad, Cp), jnp.float32),
            ),
            grid_spec=pltpu.PrefetchScalarGridSpec(
                num_scalar_prefetch=0,
                grid=(n_m, n_k),
                in_specs=[
                    pl.BlockSpec((TM, TK), lambda i, k: (i, k)),   # x tile
                    pl.BlockSpec((TK, Fp), lambda i, k: (k, 0)),   # fused W (K-tiled)
                    pl.BlockSpec((1, Fp), lambda i, k: (0, 0)),    # fused bias
                    pl.BlockSpec((Fp, Rp), lambda i, k: (0, 0)),   # w2 (resident)
                    pl.BlockSpec((1, Rp), lambda i, k: (0, 0)),    # b2
                    pl.BlockSpec((Rp, Cp), lambda i, k: (0, 0)),   # wc (resident)
                    pl.BlockSpec((1, Cp), lambda i, k: (0, 0)),    # bc
                ],
                out_specs=(
                    pl.BlockSpec((TM, Rp), lambda i, k: (i, 0)),
                    pl.BlockSpec((TM, Cp), lambda i, k: (i, 0)),
                ),
                scratch_shapes=[pltpu.VMEM((TM, Fp), jnp.float32)],
            ),
            compiler_params=pltpu.CompilerParams(
                dimension_semantics=("parallel", "arbitrary"),
                vmem_limit_bytes=32 * 1024 * 1024,
            ),
            cost_estimate=pl.CostEstimate(
                flops=flops,
                transcendentals=transcendentals,
                bytes_accessed=bytes_accessed),
        )(x_pad, wf_pad, bf_pad, w2_pad, b2_pad, wc_pad, bc_pad)

        return feat_pad[:B, :rep_dim], clus_pad[:B, :cluster_num]

    feature, cluster_m = run(image.reshape(B0, in_dim).astype(jnp.float32))

    instance_aug_m = None
    if with_aug:
        if image_aug is None:
            raise ValueError("with_aug=True requires image_aug.")
        Ba = image_aug.shape[0]
        # Only the instance branch is needed for the aug pass; the extra
        # cluster matmul in the shared kernel is O(Rp*Cp) per row -> negligible
        # next to the backbone matmul, so the same fused kernel is reused.
        instance_aug_m, _ = run(image_aug.reshape(Ba, in_dim).astype(jnp.float32))

    return [feature, cluster_m, instance_aug_m]


def init_params(key, in_dim, feature_dim, representation_dim, cluster_num):
    """Deterministic init matching _initialize_weights: weights ~ N(0, 0.01), bias = 0."""
    k_bb, k1, k2, kc = jax.random.split(key, 4)
    std = 0.01
    return {
        # surrogate backbone (linear stand-in for vit_select)
        "wbb": std * jax.random.normal(k_bb, (in_dim, feature_dim), jnp.float32),
        "bbb": jnp.zeros((1, feature_dim), jnp.float32),
        # instance_projector
        "w1": std * jax.random.normal(k1, (feature_dim, feature_dim), jnp.float32),
        "b1": jnp.zeros((1, feature_dim), jnp.float32),
        "w2": std * jax.random.normal(k2, (feature_dim, representation_dim), jnp.float32),
        "b2": jnp.zeros((1, representation_dim), jnp.float32),
        # cluster_projector
        "wc": std * jax.random.normal(kc, (feature_dim, cluster_num), jnp.float32),
        "bc": jnp.zeros((1, cluster_num), jnp.float32),
    }


def _reference_forward(image, params):
    """Pure-JAX f32 reference mirroring the PyTorch module (with linear backbone stand-in)."""
    B = image.shape[0]
    x = image.reshape(B, -1).astype(jnp.float32)
    f = x @ params["wbb"] + params["bbb"]
    h = jnp.maximum(f @ params["w1"] + params["b1"], 0.0)
    feat = h @ params["w2"] + params["b2"]
    logits = feat @ params["wc"] + params["bc"]
    return feat, jax.nn.softmax(logits, axis=1)


if __name__ == "__main__":
    # Small config consistent with the module's forward:
    # representation_dim must equal feature_dim for cluster_projector to apply.
    B, C, H, W = 2, 4, 16, 16
    feature_dim = 32
    representation_dim = 32
    cluster_num = 16

    key = jax.random.PRNGKey(0)
    k_img, k_par = jax.random.split(key)
    image = jax.random.normal(k_img, (B, C, H, W), jnp.float32)
    params = init_params(k_par, C * H * W, feature_dim, representation_dim, cluster_num)

    feature, cluster_m, instance_aug_m = cvc_2d_forward(image, params)
    jax.block_until_ready((feature, cluster_m))

    assert feature.shape == (B, representation_dim)
    assert cluster_m.shape == (B, cluster_num)
    assert instance_aug_m is None
    # softmax rows sum to ~1 (approx EUP reciprocal + bf16 matmuls -> loose tol)
    assert jnp.allclose(jnp.sum(cluster_m, axis=1), 1.0, atol=1e-2)

    # numerical sanity check against pure-JAX f32 reference (bf16 operands -> loose tol)
    feat_ref, clus_ref = _reference_forward(image, params)
    assert jnp.allclose(feature, feat_ref, atol=1e-3, rtol=1e-1)
    assert jnp.allclose(cluster_m, clus_ref, atol=1e-3, rtol=1e-1)

    print("KERNEL_OK")
</pallas_src>

<mosaic_0001>
module attributes {stable_mosaic.version = 11 : i64} {
  func.func @_cvc_kernel(%arg0: i32, %arg1: i32, %arg2: memref<16x1024xbf16, #tpu.memory_space<vmem>>, %arg3: memref<1024x128xbf16, #tpu.memory_space<vmem>>, %arg4: memref<1x128xf32, #tpu.memory_space<vmem>>, %arg5: memref<128x128xbf16, #tpu.memory_space<vmem>>, %arg6: memref<1x128xf32, #tpu.memory_space<vmem>>, %arg7: memref<128x128xbf16, #tpu.memory_space<vmem>>, %arg8: memref<1x128xf32, #tpu.memory_space<vmem>>, %arg9: memref<16x128xf32, #tpu.memory_space<vmem>>, %arg10: memref<16x128xf32, #tpu.memory_space<vmem>>, %arg11: memref<16x128xf32, #tpu.memory_space<vmem>>) attributes {dimension_semantics = [#tpu.dimension_semantics<parallel>, #tpu.dimension_semantics<arbitrary>], iteration_bounds = array<i64: 1, 1>, scalar_prefetch = 0 : i64, scratch_operands = 1 : i64, tpu.core_type = #tpu.core_type<tc>, window_params = [{transform_indices = @transform_0, window_bounds = array<i64: 16, 1024>}, {transform_indices = @transform_1, window_bounds = array<i64: 1024, 128>}, {pipeline_mode = #tpu.pipeline_mode<synchronous>, transform_indices = @transform_2, window_bounds = array<i64: 1, 128>}, {pipeline_mode = #tpu.pipeline_mode<synchronous>, transform_indices = @transform_3, window_bounds = array<i64: 128, 128>}, {pipeline_mode = #tpu.pipeline_mode<synchronous>, transform_indices = @transform_4, window_bounds = array<i64: 1, 128>}, {pipeline_mode = #tpu.pipeline_mode<synchronous>, transform_indices = @transform_5, window_bounds = array<i64: 128, 128>}, {pipeline_mode = #tpu.pipeline_mode<synchronous>, transform_indices = @transform_6, window_bounds = array<i64: 1, 128>}, {transform_indices = @transform_7, window_bounds = array<i64: 16, 128>}, {transform_indices = @transform_8, window_bounds = array<i64: 16, 128>}]} {
    %c0_i32 = arith.constant 0 : i32
    %0 = arith.cmpi eq, %arg1, %c0_i32 : i32
    %1 = arith.extui %0 : i1 to i32
    %c0_i32_0 = arith.constant 0 : i32
    %2 = arith.cmpi ne, %1, %c0_i32_0 : i32
    scf.if %2 {
      %cst_10 = arith.constant 0.000000e+00 : f32
      %12 = vector.broadcast %cst_10 : f32 to vector<16x128xf32>
      %c0_11 = arith.constant 0 : index
      %c0_12 = arith.constant 0 : index
      %13 = vector.load %arg11[%c0_11, %c0_12] : memref<16x128xf32, #tpu.memory_space<vmem>>, vector<16x128xf32>
      tpu.vector_store %arg11[%c0_11, %c0_12], %12 {strides = array<i32>} : memref<16x128xf32, #tpu.memory_space<vmem>>, vector<16x128xf32>,
    } else {
    }
    %c0 = arith.constant 0 : index
    %c0_1 = arith.constant 0 : index
    %3 = vector.load %arg11[%c0, %c0_1] : memref<16x128xf32, #tpu.memory_space<vmem>>, vector<16x128xf32>
    %c0_2 = arith.constant 0 : index
    %c0_3 = arith.constant 0 : index
    %4 = vector.load %arg2[%c0_2, %c0_3] : memref<16x1024xbf16, #tpu.memory_space<vmem>>, vector<16x1024xbf16>
    %c0_4 = arith.constant 0 : index
    %c0_5 = arith.constant 0 : index
    %5 = vector.load %arg3[%c0_4, %c0_5] : memref<1024x128xbf16, #tpu.memory_space<vmem>>, vector<1024x128xbf16>
    %cst = arith.constant dense<0.000000e+00> : vector<16x128xf32>
    %6 = tpu.matmul %4, %5, %cst {dimension_numbers = #tpu.dot_dimension_numbers<[1], [0], [0], [1], [0, 0, 1, 1], [], []>} : vector<16x1024xbf16>, vector<1024x128xbf16>, vector<16x128xf32> -> vector<16x128xf32>
    %7 = arith.addf %3, %6 : vector<16x128xf32>
    %c0_6 = arith.constant 0 : index
    %c0_7 = arith.constant 0 : index
    %8 = vector.load %arg11[%c0_6, %c0_7] : memref<16x128xf32, #tpu.memory_space<vmem>>, vector<16x128xf32>
    tpu.vector_store %arg11[%c0_6, %c0_7], %7 {strides = array<i32>} : memref<16x128xf32, #tpu.memory_space<vmem>>, vector<16x128xf32>,
    %c0_i32_8 = arith.constant 0 : i32
    %9 = arith.cmpi eq, %arg1, %c0_i32_8 : i32
    %10 = arith.extui %9 : i1 to i32
    %c0_i32_9 = arith.constant 0 : i32
    %11 = arith.cmpi ne, %10, %c0_i32_9 : i32
    scf.if %11 {
      %c0_10 = arith.constant 0 : index
      %c0_11 = arith.constant 0 : index
      %12 = vector.load %arg11[%c0_10, %c0_11] : memref<16x128xf32, #tpu.memory_space<vmem>>, vector<16x128xf32>
      %c0_12 = arith.constant 0 : index
      %c0_13 = arith.constant 0 : index
      %13 = vector.load %arg4[%c0_12, %c0_13] : memref<1x128xf32, #tpu.memory_space<vmem>>, vector<1x128xf32>
      %14 = vector.broadcast %13 : vector<1x128xf32> to vector<16x128xf32>
      %15 = arith.addf %12, %14 : vector<16x128xf32>
      %cst_14 = arith.constant 0.000000e+00 : f32
      %16 = vector.broadcast %cst_14 : f32 to vector<16x128xf32>
      %17 = arith.maximumf %15, %16 : vector<16x128xf32>
      %18 = arith.truncf %17 : vector<16x128xf32> to vector<16x128xbf16>
      %c0_15 = arith.constant 0 : index
      %c0_16 = arith.constant 0 : index
      %19 = vector.load %arg5[%c0_15, %c0_16] : memref<128x128xbf16, #tpu.memory_space<vmem>>, vector<128x128xbf16>
      %cst_17 = arith.constant dense<0.000000e+00> : vector<16x128xf32>
      %20 = tpu.matmul %18, %19, %cst_17 {dimension_numbers = #tpu.dot_dimension_numbers<[1], [0], [0], [1], [0, 0, 1, 1], [], []>} : vector<16x128xbf16>, vector<128x128xbf16>, vector<16x128xf32> -> vector<16x128xf32>
      %c0_18 = arith.constant 0 : index
      %c0_19 = arith.constant 0 : index
      %21 = vector.load %arg6[%c0_18, %c0_19] : memref<1x128xf32, #tpu.memory_space<vmem>>, vector<1x128xf32>
      %22 = vector.broadcast %21 : vector<1x128xf32> to vector<16x128xf32>
      %23 = arith.addf %20, %22 : vector<16x128xf32>
      %c0_20 = arith.constant 0 : index
      %c0_21 = arith.constant 0 : index
      %24 = vector.load %arg9[%c0_20, %c0_21] : memref<16x128xf32, #tpu.memory_space<vmem>>, vector<16x128xf32>
      tpu.vector_store %arg9[%c0_20, %c0_21], %23 {strides = array<i32>} : memref<16x128xf32, #tpu.memory_space<vmem>>, vector<16x128xf32>,
      %25 = arith.truncf %23 : vector<16x128xf32> to vector<16x128xbf16>
      %c0_22 = arith.constant 0 : index
      %c0_23 = arith.constant 0 : index
      %26 = vector.load %arg7[%c0_22, %c0_23] : memref<128x128xbf16, #tpu.memory_space<vmem>>, vector<128x128xbf16>
      %cst_24 = arith.constant dense<0.000000e+00> : vector<16x128xf32>
      %27 = tpu.matmul %25, %26, %cst_24 {dimension_numbers = #tpu.dot_dimension_numbers<[1], [0], [0], [1], [0, 0, 1, 1], [], []>} : vector<16x128xbf16>, vector<128x128xbf16>, vector<16x128xf32> -> vector<16x128xf32>
      %c0_25 = arith.constant 0 : index
      %c0_26 = arith.constant 0 : index
      %28 = vector.load %arg8[%c0_25, %c0_26] : memref<1x128xf32, #tpu.memory_space<vmem>>, vector<1x128xf32>
      %29 = vector.broadcast %28 : vector<1x128xf32> to vector<16x128xf32>
      %30 = arith.addf %27, %29 : vector<16x128xf32>
      %cst_27 = arith.constant dense<0xFF800000> : vector<16xf32>
      %31 = vector.multi_reduction <maximumf>, %30, %cst_27 [1] : vector<16x128xf32> to vector<16xf32>
      %32 = vector.shape_cast %31 : vector<16xf32> to vector<16x1xf32>
      %33 = vector.broadcast %32 : vector<16x1xf32> to vector<16x128xf32>
      %34 = arith.subf %30, %33 : vector<16x128xf32>
      %35 = math.exp %34 : vector<16x128xf32>
      %cst_28 = arith.constant dense<0.000000e+00> : vector<16xf32>
      %36 = vector.multi_reduction <add>, %35, %cst_28 [1] : vector<16x128xf32> to vector<16xf32>
      %37 = vector.shape_cast %36 : vector<16xf32> to vector<16x1xf32>
      %38 = tpu.reciprocal %37 {approx = true} : vector<16x1xf32> -> vector<16x1xf32>
      %39 = vector.broadcast %38 : vector<16x1xf32> to vector<16x128xf32>
      %40 = arith.mulf %35, %39 : vector<16x128xf32>
      %c0_29 = arith.constant 0 : index
      %c0_30 = arith.constant 0 : index
      %41 = vector.load %arg10[%c0_29, %c0_30] : memref<16x128xf32, #tpu.memory_space<vmem>>, vector<16x128xf32>
      tpu.vector_store %arg10[%c0_29, %c0_30], %40 {strides = array<i32>} : memref<16x128xf32, #tpu.memory_space<vmem>>, vector<16x128xf32>,
    } else {
    }
    return
  }
  func.func @transform_0(%arg0: i32, %arg1: i32) -> (i32, i32) {
    %c0_i32 = arith.constant 0 : i32
    return %arg0, %arg1 : i32, i32
  }
  func.func @transform_1(%arg0: i32, %arg1: i32) -> (i32, i32) {
    %c0_i32 = arith.constant 0 : i32
    %c0_i32_0 = arith.constant 0 : i32
    return %arg1, %c0_i32 : i32, i32
  }
  func.func @transform_2(%arg0: i32, %arg1: i32) -> (i32, i32) {
    %c0_i32 = arith.constant 0 : i32
    %c0_i32_0 = arith.constant 0 : i32
    %c0_i32_1 = arith.constant 0 : i32
    return %c0_i32, %c0_i32_0 : i32, i32
  }
  func.func @transform_3(%arg0: i32, %arg1: i32) -> (i32, i32) {
    %c0_i32 = arith.constant 0 : i32
    %c0_i32_0 = arith.constant 0 : i32
    %c0_i32_1 = arith.constant 0 : i32
    return %c0_i32, %c0_i32_0 : i32, i32
  }
  func.func @transform_4(%arg0: i32, %arg1: i32) -> (i32, i32) {
    %c0_i32 = arith.constant 0 : i32
    %c0_i32_0 = arith.constant 0 : i32
    %c0_i32_1 = arith.constant 0 : i32
    return %c0_i32, %c0_i32_0 : i32, i32
  }
  func.func @transform_5(%arg0: i32, %arg1: i32) -> (i32, i32) {
    %c0_i32 = arith.constant 0 : i32
    %c0_i32_0 = arith.constant 0 : i32
    %c0_i32_1 = arith.constant 0 : i32
    return %c0_i32, %c0_i32_0 : i32, i32
  }
  func.func @transform_6(%arg0: i32, %arg1: i32) -> (i32, i32) {
    %c0_i32 = arith.constant 0 : i32
    %c0_i32_0 = arith.constant 0 : i32
    %c0_i32_1 = arith.constant 0 : i32
    return %c0_i32, %c0_i32_0 : i32, i32
  }
  func.func @transform_7(%arg0: i32, %arg1: i32) -> (i32, i32) {
    %c0_i32 = arith.constant 0 : i32
    %c0_i32_0 = arith.constant 0 : i32
    return %arg0, %c0_i32 : i32, i32
  }
  func.func @transform_8(%arg0: i32, %arg1: i32) -> (i32, i32) {
    %c0_i32 = arith.constant 0 : i32
    %c0_i32_0 = arith.constant 0 : i32
    return %arg0, %c0_i32 : i32, i32
  }
}

</mosaic_0001>

<llo_original>
// kernel: tpu_custom_call.1
$region0: #{tpu_custom_call.1}
  #allocation0 [shape = 'u32[]', space=smem, size = 0x4, offset = 0x4, fixed_abs, tag = 'smem constant byte address 0x4 - core index']
  #allocation1 [shape = 'u32[144,128]{1,0:T(1,128)}', space=vmem, size = 0x12000, scoped, tag = 'internal scratch']
  #allocation2 [shape = 'f32[16,128]{1,0:T(8,128)}', space=vmem, size = 0x2000, scoped, tag = 'scratch operand']
  %s0 = inlined_call_operand.hbm [shape: bf16[16,1024], index: 0, kind: input, shape index: {}]
  %s1 = inlined_call_operand.hbm [shape: bf16[1024,128], index: 1, kind: input, shape index: {}]
  %s2 = inlined_call_operand.vmem [shape: f32[1,128], index: 2, kind: input, shape index: {}]
  %s3 = inlined_call_operand.hbm [shape: bf16[128,128], index: 3, kind: input, shape index: {}]
  %s4 = inlined_call_operand.vmem [shape: f32[1,128], index: 4, kind: input, shape index: {}]
  %s5 = inlined_call_operand.hbm [shape: bf16[128,128], index: 5, kind: input, shape index: {}]
  %s6 = inlined_call_operand.vmem [shape: f32[1,128], index: 6, kind: input, shape index: {}]
  %s7 = inlined_call_operand.hbm [shape: f32[16,128], index: 7, kind: output, shape index: {0}]
  %s8 = inlined_call_operand.hbm [shape: f32[16,128], index: 8, kind: output, shape index: {1}]
  %9 = xla_tuple %s7, %s8
  %s10 = sld [smem:[#allocation0]]
  $region70: #{tpu_custom_call.1} parent=0
    _
  %s12 = ssub.s32 1, %s10
  %s13 = scalar_select 0, %s12, %s10
  $region1: #{tpu_custom_call.1} parent=0
    #allocation3 [shape = 'u8[32768]{0}', space=vmem, size = 0x8000, scoped, tag = 'input window, operand 0, single buffered']
    #allocation4 [shape = 's32[1]{0}', space=sflag, size = 0x4, scoped, tag = 'scoped memory for tpu_custom_call.1']
    #allocation5 [shape = 's32[1]{0}', space=sflag, size = 0x4, scoped, tag = 'scoped memory for tpu_custom_call.1']
    #allocation6 [shape = 'u8[262144]{0}', space=vmem, size = 0x40000, scoped, tag = 'input window, operand 1, single buffered']
    #allocation7 [shape = 's32[1]{0}', space=sflag, size = 0x4, scoped, tag = 'scoped memory for tpu_custom_call.1']
    #allocation8 [shape = 'u8[32768]{0}', space=vmem, size = 0x8000, scoped, tag = 'input window, operand 3, single buffered']
    #allocation9 [shape = 'u8[32768]{0}', space=vmem, size = 0x8000, scoped, tag = 'input window, operand 5, single buffered']
    #allocation10 [shape = 's32[1]{0}', space=sflag, size = 0x4, scoped, tag = 'scoped memory for tpu_custom_call.1']
    #allocation11 [shape = 'u8[8192]{0}', space=vmem, size = 0x2000, scoped, tag = 'output window, operand 0, single buffered']
    #allocation12 [shape = 'u8[8192]{0}', space=vmem, size = 0x2000, scoped, tag = 'output window, operand 1, single buffered']
    #allocation13 [shape = 's32[1]{0}', space=sflag, size = 0x4, scoped, tag = 'scoped memory for tpu_custom_call.1']
    %14 = vsyncpa [#allocation4], 0
    %15 = vsyncpa [#allocation7], 0
    %16 = vsyncpa [#allocation10], 0
    %17 = vsyncpa [#allocation5], 0
    %18 = vsyncpa [#allocation13], 0
    // Predicated region
    $region2: #{tpu_custom_call.1} parent=1 // pred_check
      _
    $region3: #{tpu_custom_call.1} parent=1 // pred_check_branch
      %20 = sbr.rel (0) target = $region5
    $region4: #{tpu_custom_call.1} parent=1 // pred_region
      %s22 = ssub.s32 1024, 1024
      %23 = vsyncadd [#allocation4], %s22
      %s24 = sshll.u32 [#allocation3], 4
      %s25 = int_to_ptr.vmem [resolvable:$true] %s24
      %30 = dma.hbm_to_vmem [thread:$0]  %s0, 1024, %s25, [#allocation4], 512, 512, 32
    $region5: #{tpu_custom_call.1} parent=1 // pred_fallthru
      _
    // Predicated region
    $region6: #{tpu_custom_call.1} parent=1 // pred_check
      _
    $region7: #{tpu_custom_call.1} parent=1 // pred_check_branch
      %32 = sbr.rel (0) target = $region9
    $region8: #{tpu_custom_call.1} parent=1 // pred_region
      %s34 = ssub.s32 8192, 8192
      %35 = vsyncadd [#allocation7], %s34
      %s36 = sshll.u32 [#allocation6], 4
      %s37 = int_to_ptr.vmem [resolvable:$true] %s36
      %42 = dma.hbm_to_vmem [thread:$0]  %s1, 8192, %s37, [#allocation7], 64, 64, 4
    $region9: #{tpu_custom_call.1} parent=1 // pred_fallthru
      _
    // Predicated region
    $region10: #{tpu_custom_call.1} parent=1 // pred_check
      _
    $region11: #{tpu_custom_call.1} parent=1 // pred_check_branch
      %44 = sbr.rel (0) target = $region13
    $region12: #{tpu_custom_call.1} parent=1 // pred_region
      _
    $region13: #{tpu_custom_call.1} parent=1 // pred_fallthru
      _
    // Predicated region
    $region14: #{tpu_custom_call.1} parent=1 // pred_check
      _
    $region15: #{tpu_custom_call.1} parent=1 // pred_check_branch
      %46 = sbr.rel (0) target = $region17
    $region16: #{tpu_custom_call.1} parent=1 // pred_region
      %s48 = ssub.s32 1024, 1024
      %49 = vsyncadd [#allocation7], %s48
      %s50 = sshll.u32 [#allocation8], 4
      %s51 = int_to_ptr.vmem [resolvable:$true] %s50
      %56 = dma.hbm_to_vmem [thread:$0]  %s3, 1024, %s51, [#allocation7], 64, 64, 4
    $region17: #{tpu_custom_call.1} parent=1 // pred_fallthru
      _
    // Predicated region
    $region18: #{tpu_custom_call.1} parent=1 // pred_check
      _
    $region19: #{tpu_custom_call.1} parent=1 // pred_check_branch
      %58 = sbr.rel (0) target = $region21
    $region20: #{tpu_custom_call.1} parent=1 // pred_region
      _
    $region21: #{tpu_custom_call.1} parent=1 // pred_fallthru
      _
    // Predicated region
    $region22: #{tpu_custom_call.1} parent=1 // pred_check
      _
    $region23: #{tpu_custom_call.1} parent=1 // pred_check_branch
      %60 = sbr.rel (0) target = $region25
    $region24: #{tpu_custom_call.1} parent=1 // pred_region
      %s62 = ssub.s32 1024, 1024
      %63 = vsyncadd [#allocation10], %s62
      %s64 = sshll.u32 [#allocation9], 4
      %s65 = int_to_ptr.vmem [resolvable:$true] %s64
      %70 = dma.hbm_to_vmem [thread:$0]  %s5, 1024, %s65, [#allocation10], 64, 64, 4
    $region25: #{tpu_custom_call.1} parent=1 // pred_fallthru
      _
    // Predicated region
    $region26: #{tpu_custom_call.1} parent=1 // pred_check
      _
    $region27: #{tpu_custom_call.1} parent=1 // pred_check_branch
      %72 = sbr.rel (0) target = $region29
    $region28: #{tpu_custom_call.1} parent=1 // pred_region
      _
    $region29: #{tpu_custom_call.1} parent=1 // pred_fallthru
      _
    // Predicated region
    $region30: #{tpu_custom_call.1} parent=1 // pred_check
      _
    $region31: #{tpu_custom_call.1} parent=1 // pred_check_branch
      %74 = sbr.rel (0) target = $region33
    $region32: #{tpu_custom_call.1} parent=1 // pred_region
      %75 = dma.done [#allocation4], 1024
    $region33: #{tpu_custom_call.1} parent=1 // pred_fallthru
      _
    // Predicated region
    $region34: #{tpu_custom_call.1} parent=1 // pred_check
      _
    $region35: #{tpu_custom_call.1} parent=1 // pred_check_branch
      %77 = sbr.rel (0) target = $region37
    $region36: #{tpu_custom_call.1} parent=1 // pred_region
      %78 = dma.done [#allocation7], 8192
    $region37: #{tpu_custom_call.1} parent=1 // pred_fallthru
      _
    // Predicated region
    $region38: #{tpu_custom_call.1} parent=1 // pred_check
      _
    $region39: #{tpu_custom_call.1} parent=1 // pred_check_branch
      %80 = sbr.rel (0) target = $region41
    $region40: #{tpu_custom_call.1} parent=1 // pred_region
      %81 = dma.done [#allocation7], 1024
    $region41: #{tpu_custom_call.1} parent=1 // pred_fallthru
      _
    // Predicated region
    $region42: #{tpu_custom_call.1} parent=1 // pred_check
      _
    $region43: #{tpu_custom_call.1} parent=1 // pred_check_branch
      %83 = sbr.rel (0) target = $region45
    $region44: #{tpu_custom_call.1} parent=1 // pred_region
      %84 = dma.done [#allocation10], 1024
    $region45: #{tpu_custom_call.1} parent=1 // pred_fallthru
      _
    %p86 = scmp.eq.s32.totalorder 0, 0
    // Predicated region
    $region46: #{tpu_custom_call.1} parent=1 // pred_check
      %p87 = pneg %p86
    $region47: #{tpu_custom_call.1} parent=1 // pred_check_branch
      %89 = sbr.rel (%p87) target = $region49
    $region48: #{tpu_custom_call.1} parent=1 // pred_region
      %90 = vst [vmem:[#allocation2] sm:$0xff] 0.0
      %91 = vst [vmem:[#allocation2 + $0x8] sm:$0xff] 0.0
    $region49: #{tpu_custom_call.1} parent=1 // pred_fallthru
      _
    %v92 = vld [vmem:[#allocation2] sm:$0xff]
    %v93 = vld [vmem:[#allocation2 + $0x8] sm:$0xff]
    %v94 = vld [vmem:[#allocation3] sm:$0xff]
    %v95 = vld [vmem:[#allocation3 + $0x8] sm:$0xff]
    %v96 = vld [vmem:[#allocation3 + $0x10] sm:$0xff]
    %v97 = vld [vmem:[#allocation3 + $0x18] sm:$0xff]
    %v98 = vld [vmem:[#allocation3 + $0x20] sm:$0xff]
    %v99 = vld [vmem:[#allocation3 + $0x28] sm:$0xff]
    %v100 = vld [vmem:[#allocation3 + $0x30] sm:$0xff]
    %v101 = vld [vmem:[#allocation3 + $0x38] sm:$0xff]
    %v102 = vld [vmem:[#allocation6] sm:$0xf]
    %v103 = vld [vmem:[#allocation6 + $0x4] sm:$0xf]
    %v104 = vld [vmem:[#allocation6 + $0x8] sm:$0xf]
    %v105 = vld [vmem:[#allocation6 + $0xc] sm:$0xf]
    %v106 = vld [vmem:[#allocation6 + $0x10] sm:$0xf]
    %v107 = vld [vmem:[#allocation6 + $0x14] sm:$0xf]
    %v108 = vld [vmem:[#allocation6 + $0x18] sm:$0xf]
    %v109 = vld [vmem:[#allocation6 + $0x1c] sm:$0xf]
    %v110 = vld [vmem:[#allocation6 + $0x20] sm:$0xf]
    %v111 = vld [vmem:[#allocation6 + $0x24] sm:$0xf]
    %v112 = vld [vmem:[#allocation6 + $0x28] sm:$0xf]
    %v113 = vld [vmem:[#allocation6 + $0x2c] sm:$0xf]
    %v114 = vld [vmem:[#allocation6 + $0x30] sm:$0xf]
    %v115 = vld [vmem:[#allocation6 + $0x34] sm:$0xf]
    %v116 = vld [vmem:[#allocation6 + $0x38] sm:$0xf]
    %v117 = vld [vmem:[#allocation6 + $0x3c] sm:$0xf]
    %v118 = vld [vmem:[#allocation6 + $0x40] sm:$0xf]
    %v119 = vld [vmem:[#allocation6 + $0x44] sm:$0xf]
    %v120 = vld [vmem:[#allocation6 + $0x48] sm:$0xf]
    %v121 = vld [vmem:[#allocation6 + $0x4c] sm:$0xf]
    %v122 = vld [vmem:[#allocation6 + $0x50] sm:$0xf]
    %v123 = vld [vmem:[#allocation6 + $0x54] sm:$0xf]
    %v124 = vld [vmem:[#allocation6 + $0x58] sm:$0xf]
    %v125 = vld [vmem:[#allocation6 + $0x5c] sm:$0xf]
    %v126 = vld [vmem:[#allocation6 + $0x60] sm:$0xf]
    %v127 = vld [vmem:[#allocation6 + $0x64] sm:$0xf]
    %v128 = vld [vmem:[#allocation6 + $0x68] sm:$0xf]
    %v129 = vld [vmem:[#allocation6 + $0x6c] sm:$0xf]
    %v130 = vld [vmem:[#allocation6 + $0x70] sm:$0xf]
    %v131 = vld [vmem:[#allocation6 + $0x74] sm:$0xf]
    %v132 = vld [vmem:[#allocation6 + $0x78] sm:$0xf]
    %v133 = vld [vmem:[#allocation6 + $0x7c] sm:$0xf]
    %v134 = vld [vmem:[#allocation6 + $0x80] sm:$0xf]
    %v135 = vld [vmem:[#allocation6 + $0x84] sm:$0xf]
    %v136 = vld [vmem:[#allocation6 + $0x88] sm:$0xf]
    %v137 = vld [vmem:[#allocation6 + $0x8c] sm:$0xf]
    %v138 = vld [vmem:[#allocation6 + $0x90] sm:$0xf]
    %v139 = vld [vmem:[#allocation6 + $0x94] sm:$0xf]
    %v140 = vld [vmem:[#allocation6 + $0x98] sm:$0xf]
    %v141 = vld [vmem:[#allocation6 + $0x9c] sm:$0xf]
    %v142 = vld [vmem:[#allocation6 + $0xa0] sm:$0xf]
    %v143 = vld [vmem:[#allocation6 + $0xa4] sm:$0xf]
    %v144 = vld [vmem:[#allocation6 + $0xa8] sm:$0xf]
    %v145 = vld [vmem:[#allocation6 + $0xac] sm:$0xf]
    %v146 = vld [vmem:[#allocation6 + $0xb0] sm:$0xf]
    %v147 = vld [vmem:[#allocation6 + $0xb4] sm:$0xf]
    %v148 = vld [vmem:[#allocation6 + $0xb8] sm:$0xf]
    %v149 = vld [vmem:[#allocation6 + $0xbc] sm:$0xf]
    %v150 = vld [vmem:[#allocation6 + $0xc0] sm:$0xf]
    %v151 = vld [vmem:[#allocation6 + $0xc4] sm:$0xf]
    %v152 = vld [vmem:[#allocation6 + $0xc8] sm:$0xf]
    %v153 = vld [vmem:[#allocation6 + $0xcc] sm:$0xf]
    %v154 = vld [vmem:[#allocation6 + $0xd0] sm:$0xf]
    %v155 = vld [vmem:[#allocation6 + $0xd4] sm:$0xf]
    %v156 = vld [vmem:[#allocation6 + $0xd8] sm:$0xf]
    %v157 = vld [vmem:[#allocation6 + $0xdc] sm:$0xf]
    %v158 = vld [vmem:[#allocation6 + $0xe0] sm:$0xf]
    %v159 = vld [vmem:[#allocation6 + $0xe4] sm:$0xf]
    %v160 = vld [vmem:[#allocation6 + $0xe8] sm:$0xf]
    %v161 = vld [vmem:[#allocation6 + $0xec] sm:$0xf]
    %v162 = vld [vmem:[#allocation6 + $0xf0] sm:$0xf]
    %v163 = vld [vmem:[#allocation6 + $0xf4] sm:$0xf]
    %v164 = vld [vmem:[#allocation6 + $0xf8] sm:$0xf]
    %v165 = vld [vmem:[#allocation6 + $0xfc] sm:$0xf]
    %v166 = vld [vmem:[#allocation6 + $0x100] sm:$0xf]
    %v167 = vld [vmem:[#allocation6 + $0x104] sm:$0xf]
    %v168 = vld [vmem:[#allocation6 + $0x108] sm:$0xf]
    %v169 = vld [vmem:[#allocation6 + $0x10c] sm:$0xf]
    %v170 = vld [vmem:[#allocation6 + $0x110] sm:$0xf]
    %v171 = vld [vmem:[#allocation6 + $0x114] sm:$0xf]
    %v172 = vld [vmem:[#allocation6 + $0x118] sm:$0xf]
    %v173 = vld [vmem:[#allocation6 + $0x11c] sm:$0xf]
    %v174 = vld [vmem:[#allocation6 + $0x120] sm:$0xf]
    %v175 = vld [vmem:[#allocation6 + $0x124] sm:$0xf]
    %v176 = vld [vmem:[#allocation6 + $0x128] sm:$0xf]
    %v177 = vld [vmem:[#allocation6 + $0x12c] sm:$0xf]
    %v178 = vld [vmem:[#allocation6 + $0x130] sm:$0xf]
    %v179 = vld [vmem:[#allocation6 + $0x134] sm:$0xf]
    %v180 = vld [vmem:[#allocation6 + $0x138] sm:$0xf]
    %v181 = vld [vmem:[#allocation6 + $0x13c] sm:$0xf]
    %v182 = vld [vmem:[#allocation6 + $0x140] sm:$0xf]
    %v183 = vld [vmem:[#allocation6 + $0x144] sm:$0xf]
    %v184 = vld [vmem:[#allocation6 + $0x148] sm:$0xf]
    %v185 = vld [vmem:[#allocation6 + $0x14c] sm:$0xf]
    %v186 = vld [vmem:[#allocation6 + $0x150] sm:$0xf]
    %v187 = vld [vmem:[#allocation6 + $0x154] sm:$0xf]
    %v188 = vld [vmem:[#allocation6 + $0x158] sm:$0xf]
    %v189 = vld [vmem:[#allocation6 + $0x15c] sm:$0xf]
    %v190 = vld [vmem:[#allocation6 + $0x160] sm:$0xf]
    %v191 = vld [vmem:[#allocation6 + $0x164] sm:$0xf]
    %v192 = vld [vmem:[#allocation6 + $0x168] sm:$0xf]
    %v193 = vld [vmem:[#allocation6 + $0x16c] sm:$0xf]
    %v194 = vld [vmem:[#allocation6 + $0x170] sm:$0xf]
    %v195 = vld [vmem:[#allocation6 + $0x174] sm:$0xf]
    %v196 = vld [vmem:[#allocation6 + $0x178] sm:$0xf]
    %v197 = vld [vmem:[#allocation6 + $0x17c] sm:$0xf]
    %v198 = vld [vmem:[#allocation6 + $0x180] sm:$0xf]
    %v199 = vld [vmem:[#allocation6 + $0x184] sm:$0xf]
    %v200 = vld [vmem:[#allocation6 + $0x188] sm:$0xf]
    %v201 = vld [vmem:[#allocation6 + $0x18c] sm:$0xf]
    %v202 = vld [vmem:[#allocation6 + $0x190] sm:$0xf]
    %v203 = vld [vmem:[#allocation6 + $0x194] sm:$0xf]
    %v204 = vld [vmem:[#allocation6 + $0x198] sm:$0xf]
    %v205 = vld [vmem:[#allocation6 + $0x19c] sm:$0xf]
    %v206 = vld [vmem:[#allocation6 + $0x1a0] sm:$0xf]
    %v207 = vld [vmem:[#allocation6 + $0x1a4] sm:$0xf]
    %v208 = vld [vmem:[#allocation6 + $0x1a8] sm:$0xf]
    %v209 = vld [vmem:[#allocation6 + $0x1ac] sm:$0xf]
    %v210 = vld [vmem:[#allocation6 + $0x1b0] sm:$0xf]
    %v211 = vld [vmem:[#allocation6 + $0x1b4] sm:$0xf]
    %v212 = vld [vmem:[#allocation6 + $0x1b8] sm:$0xf]
    %v213 = vld [vmem:[#allocation6 + $0x1bc] sm:$0xf]
    %v214 = vld [vmem:[#allocation6 + $0x1c0] sm:$0xf]
    %v215 = vld [vmem:[#allocation6 + $0x1c4] sm:$0xf]
    %v216 = vld [vmem:[#allocation6 + $0x1c8] sm:$0xf]
    %v217 = vld [vmem:[#allocation6 + $0x1cc] sm:$0xf]
    %v218 = vld [vmem:[#allocation6 + $0x1d0] sm:$0xf]
    %v219 = vld [vmem:[#allocation6 + $0x1d4] sm:$0xf]
    %v220 = vld [vmem:[#allocation6 + $0x1d8] sm:$0xf]
    %v221 = vld [vmem:[#allocation6 + $0x1dc] sm:$0xf]
    %v222 = vld [vmem:[#allocation6 + $0x1e0] sm:$0xf]
    %v223 = vld [vmem:[#allocation6 + $0x1e4] sm:$0xf]
    %v224 = vld [vmem:[#allocation6 + $0x1e8] sm:$0xf]
    %v225 = vld [vmem:[#allocation6 + $0x1ec] sm:$0xf]
    %v226 = vld [vmem:[#allocation6 + $0x1f0] sm:$0xf]
    %v227 = vld [vmem:[#allocation6 + $0x1f4] sm:$0xf]
    %v228 = vld [vmem:[#allocation6 + $0x1f8] sm:$0xf]
    %v229 = vld [vmem:[#allocation6 + $0x1fc] sm:$0xf]
    %v238 = vunpack.c.l.b16 %v94
    %v239 = vunpack.c.h.b16 %v94
    %v240 = vunpack.c.l.b16 %v95
    %v241 = vunpack.c.h.b16 %v95
    %v242 = vunpack.c.l.b16 %v96
    %v243 = vunpack.c.h.b16 %v96
    %v244 = vunpack.c.l.b16 %v97
    %v245 = vunpack.c.h.b16 %v97
    %v246 = vunpack.c.l.b16 %v98
    %v247 = vunpack.c.h.b16 %v98
    %v248 = vunpack.c.l.b16 %v99
    %v249 = vunpack.c.h.b16 %v99
    %v250 = vunpack.c.l.b16 %v100
    %v251 = vunpack.c.h.b16 %v100
    %v252 = vunpack.c.l.b16 %v101
    %v253 = vunpack.c.h.b16 %v101
    %v254 = vpack.c.b16 %v246, %v238
    %v255 = vpack.c.b16 %v247, %v239
    %v256 = vpack.c.b16 %v248, %v240
    %v257 = vpack.c.b16 %v249, %v241
    %v258 = vpack.c.b16 %v250, %v242
    %v259 = vpack.c.b16 %v251, %v243
    %v260 = vpack.c.b16 %v252, %v244
    %v261 = vpack.c.b16 %v253, %v245
    %v398 = vunpack.c.l.b16 %v102
    %v399 = vunpack.c.l.b16 %v103
    %v400 = vunpack.c.l.b16 %v104
    %v401 = vunpack.c.l.b16 %v105
    %v402 = vunpack.c.l.b16 %v106
    %v403 = vunpack.c.l.b16 %v107
    %v404 = vunpack.c.l.b16 %v108
    %v405 = vunpack.c.l.b16 %v109
    %v406 = vunpack.c.l.b16 %v110
    %v407 = vunpack.c.l.b16 %v111
    %v408 = vunpack.c.l.b16 %v112
    %v409 = vunpack.c.l.b16 %v113
    %v410 = vunpack.c.l.b16 %v114
    %v411 = vunpack.c.l.b16 %v115
    %v412 = vunpack.c.l.b16 %v116
    %v413 = vunpack.c.l.b16 %v117
    %v414 = vunpack.c.l.b16 %v118
    %v415 = vunpack.c.l.b16 %v119
    %v416 = vunpack.c.l.b16 %v120
    %v417 = vunpack.c.l.b16 %v121
    %v418 = vunpack.c.l.b16 %v122
    %v419 = vunpack.c.l.b16 %v123
    %v420 = vunpack.c.l.b16 %v124
    %v421 = vunpack.c.l.b16 %v125
    %v422 = vunpack.c.l.b16 %v126
    %v423 = vunpack.c.l.b16 %v127
    %v424 = vunpack.c.l.b16 %v128
    %v425 = vunpack.c.l.b16 %v129
    %v426 = vunpack.c.l.b16 %v130
    %v427 = vunpack.c.l.b16 %v131
    %v428 = vunpack.c.l.b16 %v132
    %v429 = vunpack.c.l.b16 %v133
    %v430 = vunpack.c.l.b16 %v134
    %v431 = vunpack.c.l.b16 %v135
    %v432 = vunpack.c.l.b16 %v136
    %v433 = vunpack.c.l.b16 %v137
    %v434 = vunpack.c.l.b16 %v138
    %v435 = vunpack.c.l.b16 %v139
    %v436 = vunpack.c.l.b16 %v140
    %v437 = vunpack.c.l.b16 %v141
    %v438 = vunpack.c.l.b16 %v142
    %v439 = vunpack.c.l.b16 %v143
    %v440 = vunpack.c.l.b16 %v144
    %v441 = vunpack.c.l.b16 %v145
    %v442 = vunpack.c.l.b16 %v146
    %v443 = vunpack.c.l.b16 %v147
    %v444 = vunpack.c.l.b16 %v148
    %v445 = vunpack.c.l.b16 %v149
    %v446 = vunpack.c.l.b16 %v150
    %v447 = vunpack.c.l.b16 %v151
    %v448 = vunpack.c.l.b16 %v152
    %v449 = vunpack.c.l.b16 %v153
    %v450 = vunpack.c.l.b16 %v154
    %v451 = vunpack.c.l.b16 %v155
    %v452 = vunpack.c.l.b16 %v156
    %v453 = vunpack.c.l.b16 %v157
    %v454 = vunpack.c.l.b16 %v158
    %v455 = vunpack.c.l.b16 %v159
    %v456 = vunpack.c.l.b16 %v160
    %v457 = vunpack.c.l.b16 %v161
    %v458 = vunpack.c.l.b16 %v162
    %v459 = vunpack.c.l.b16 %v163
    %v460 = vunpack.c.l.b16 %v164
    %v461 = vunpack.c.l.b16 %v165
    %v462 = vunpack.c.l.b16 %v166
    %v463 = vunpack.c.l.b16 %v167
    %v464 = vunpack.c.l.b16 %v168
    %v465 = vunpack.c.l.b16 %v169
    %v466 = vunpack.c.l.b16 %v170
    %v467 = vunpack.c.l.b16 %v171
    %v468 = vunpack.c.l.b16 %v172
    %v469 = vunpack.c.l.b16 %v173
    %v470 = vunpack.c.l.b16 %v174
    %v471 = vunpack.c.l.b16 %v175
    %v472 = vunpack.c.l.b16 %v176
    %v473 = vunpack.c.l.b16 %v177
    %v474 = vunpack.c.l.b16 %v178
    %v475 = vunpack.c.l.b16 %v179
    %v476 = vunpack.c.l.b16 %v180
    %v477 = vunpack.c.l.b16 %v181
    %v478 = vunpack.c.l.b16 %v182
    %v479 = vunpack.c.l.b16 %v183
    %v480 = vunpack.c.l.b16 %v184
    %v481 = vunpack.c.l.b16 %v185
    %v482 = vunpack.c.l.b16 %v186
    %v483 = vunpack.c.l.b16 %v187
    %v484 = vunpack.c.l.b16 %v188
    %v485 = vunpack.c.l.b16 %v189
    %v486 = vunpack.c.l.b16 %v190
    %v487 = vunpack.c.l.b16 %v191
    %v488 = vunpack.c.l.b16 %v192
    %v489 = vunpack.c.l.b16 %v193
    %v490 = vunpack.c.l.b16 %v194
    %v491 = vunpack.c.l.b16 %v195
    %v492 = vunpack.c.l.b16 %v196
    %v493 = vunpack.c.l.b16 %v197
    %v494 = vunpack.c.l.b16 %v198
    %v495 = vunpack.c.l.b16 %v199
    %v496 = vunpack.c.l.b16 %v200
    %v497 = vunpack.c.l.b16 %v201
    %v498 = vunpack.c.l.b16 %v202
    %v499 = vunpack.c.l.b16 %v203
    %v500 = vunpack.c.l.b16 %v204
    %v501 = vunpack.c.l.b16 %v205
    %v502 = vunpack.c.l.b16 %v206
    %v503 = vunpack.c.l.b16 %v207
    %v504 = vunpack.c.l.b16 %v208
    %v505 = vunpack.c.l.b16 %v209
    %v506 = vunpack.c.l.b16 %v210
    %v507 = vunpack.c.l.b16 %v211
    %v508 = vunpack.c.l.b16 %v212
    %v509 = vunpack.c.l.b16 %v213
    %v510 = vunpack.c.l.b16 %v214
    %v511 = vunpack.c.l.b16 %v215
    %v512 = vunpack.c.l.b16 %v216
    %v513 = vunpack.c.l.b16 %v217
    %v514 = vunpack.c.l.b16 %v218
    %v515 = vunpack.c.l.b16 %v219
    %v516 = vunpack.c.l.b16 %v220
    %v517 = vunpack.c.l.b16 %v221
    %v518 = vunpack.c.l.b16 %v222
    %v519 = vunpack.c.l.b16 %v223
    %v520 = vunpack.c.l.b16 %v224
    %v521 = vunpack.c.l.b16 %v225
    %v522 = vunpack.c.l.b16 %v226
    %v523 = vunpack.c.l.b16 %v227
    %v524 = vunpack.c.l.b16 %v228
    %v525 = vunpack.c.l.b16 %v229
    %v526 = vpack.c.b16 %v399, %v398
    %v527 = vpack.c.b16 %v401, %v400
    %v528 = vpack.c.b16 %v403, %v402
    %v529 = vpack.c.b16 %v405, %v404
    %v530 = vpack.c.b16 %v407, %v406
    %v531 = vpack.c.b16 %v409, %v408
    %v532 = vpack.c.b16 %v411, %v410
    %v533 = vpack.c.b16 %v413, %v412
    %v534 = vpack.c.b16 %v415, %v414
    %v535 = vpack.c.b16 %v417, %v416
    %v536 = vpack.c.b16 %v419, %v418
    %v537 = vpack.c.b16 %v421, %v420
    %v538 = vpack.c.b16 %v423, %v422
    %v539 = vpack.c.b16 %v425, %v424
    %v540 = vpack.c.b16 %v427, %v426
    %v541 = vpack.c.b16 %v429, %v428
    %v542 = vpack.c.b16 %v431, %v430
    %v543 = vpack.c.b16 %v433, %v432
    %v544 = vpack.c.b16 %v435, %v434
    %v545 = vpack.c.b16 %v437, %v436
    %v546 = vpack.c.b16 %v439, %v438
    %v547 = vpack.c.b16 %v441, %v440
    %v548 = vpack.c.b16 %v443, %v442
    %v549 = vpack.c.b16 %v445, %v444
    %v550 = vpack.c.b16 %v447, %v446
    %v551 = vpack.c.b16 %v449, %v448
    %v552 = vpack.c.b16 %v451, %v450
    %v553 = vpack.c.b16 %v453, %v452
    %v554 = vpack.c.b16 %v455, %v454
    %v555 = vpack.c.b16 %v457, %v456
    %v556 = vpack.c.b16 %v459, %v458
    %v557 = vpack.c.b16 %v461, %v460
    %v558 = vpack.c.b16 %v463, %v462
    %v559 = vpack.c.b16 %v465, %v464
    %v560 = vpack.c.b16 %v467, %v466
    %v561 = vpack.c.b16 %v469, %v468
    %v562 = vpack.c.b16 %v471, %v470
    %v563 = vpack.c.b16 %v473, %v472
    %v564 = vpack.c.b16 %v475, %v474
    %v565 = vpack.c.b16 %v477, %v476
    %v566 = vpack.c.b16 %v479, %v478
    %v567 = vpack.c.b16 %v481, %v480
    %v568 = vpack.c.b16 %v483, %v482
    %v569 = vpack.c.b16 %v485, %v484
    %v570 = vpack.c.b16 %v487, %v486
    %v571 = vpack.c.b16 %v489, %v488
    %v572 = vpack.c.b16 %v491, %v490
    %v573 = vpack.c.b16 %v493, %v492
    %v574 = vpack.c.b16 %v495, %v494
    %v575 = vpack.c.b16 %v497, %v496
    %v576 = vpack.c.b16 %v499, %v498
    %v577 = vpack.c.b16 %v501, %v500
    %v578 = vpack.c.b16 %v503, %v502
    %v579 = vpack.c.b16 %v505, %v504
    %v580 = vpack.c.b16 %v507, %v506
    %v581 = vpack.c.b16 %v509, %v508
    %v582 = vpack.c.b16 %v511, %v510
    %v583 = vpack.c.b16 %v513, %v512
    %v584 = vpack.c.b16 %v515, %v514
    %v585 = vpack.c.b16 %v517, %v516
    %v586 = vpack.c.b16 %v519, %v518
    %v587 = vpack.c.b16 %v521, %v520
    %v588 = vpack.c.b16 %v523, %v522
    %v589 = vpack.c.b16 %v525, %v524
    %654 = vmatprep.subr.bf16.mxu0 0
    %655 = vmatpush1.bf16.msra.mxu0 %v526
    %656 = vmatprep.subr.bf16.mxu0 0
    %657 = vmatpush1.bf16.msra.mxu0 %v527
    %658 = vmatprep.subr.bf16.mxu0 0
    %659 = vmatpush1.bf16.msra.mxu0 %v528
    %660 = vmatprep.subr.bf16.mxu0 0
    %661 = vmatpush1.bf16.msra.mxu0 %v529
    %662 = vmatprep.subr.bf16.mxu0 0
    %663 = vmatpush1.bf16.msra.mxu0 %v530
    %664 = vmatprep.subr.bf16.mxu0 0
    %665 = vmatpush1.bf16.msra.mxu0 %v531
    %666 = vmatprep.subr.bf16.mxu0 0
    %667 = vmatpush1.bf16.msra.mxu0 %v532
    %668 = vmatprep.subr.bf16.mxu0 0
    %669 = vmatpush1.bf16.msra.mxu0 %v533
    %670 = vmatprep.subr.bf16.mxu0 0
    %671 = vmatpush1.bf16.msra.mxu0 %v534
    %672 = vmatprep.subr.bf16.mxu0 0
    %673 = vmatpush1.bf16.msra.mxu0 %v535
    %674 = vmatprep.subr.bf16.mxu0 0
    %675 = vmatpush1.bf16.msra.mxu0 %v536
    %676 = vmatprep.subr.bf16.mxu0 0
    %677 = vmatpush1.bf16.msra.mxu0 %v537
    %678 = vmatprep.subr.bf16.mxu0 0
    %679 = vmatpush1.bf16.msra.mxu0 %v538
    %680 = vmatprep.subr.bf16.mxu0 0
    %681 = vmatpush1.bf16.msra.mxu0 %v539
    %682 = vmatprep.subr.bf16.mxu0 0
    %683 = vmatpush1.bf16.msra.mxu0 %v540
    %684 = vmatprep.subr.bf16.mxu0 0
    %685 = vmatpush1.bf16.msra.mxu0 %v541
    %686 = vmatprep.mubr.bf16.mxu0 %v255
    %687 = vmatmul.mubr.bf16.gmra.mrb[0].mxu0 %v254
    %v688 = vpop.f32.mrb[0].mxu0
    %v689 = vadd.f32 0.0, %v688
    %v690 = vpop.f32.mrb[0].mxu0
    %v691 = vpop.f32.mrb[0].mxu0
    %v692 = vadd.f32 0.0, %v691
    %v693 = vpop.f32.mrb[0].mxu0
    %694 = vdwg.mxu0
    %695 = vmatprep.subr.bf16.mxu0 0
    %696 = vmatpush1.bf16.msra.mxu0 %v542
    %697 = vmatprep.subr.bf16.mxu0 0
    %698 = vmatpush1.bf16.msra.mxu0 %v543
    %699 = vmatprep.subr.bf16.mxu0 0
    %700 = vmatpush1.bf16.msra.mxu0 %v544
    %701 = vmatprep.subr.bf16.mxu0 0
    %702 = vmatpush1.bf16.msra.mxu0 %v545
    %703 = vmatprep.subr.bf16.mxu0 0
    %704 = vmatpush1.bf16.msra.mxu0 %v546
    %705 = vmatprep.subr.bf16.mxu0 0
    %706 = vmatpush1.bf16.msra.mxu0 %v547
    %707 = vmatprep.subr.bf16.mxu0 0
    %708 = vmatpush1.bf16.msra.mxu0 %v548
    %709 = vmatprep.subr.bf16.mxu0 0
    %710 = vmatpush1.bf16.msra.mxu0 %v549
    %711 = vmatprep.subr.bf16.mxu0 0
    %712 = vmatpush1.bf16.msra.mxu0 %v550
    %713 = vmatprep.subr.bf16.mxu0 0
    %714 = vmatpush1.bf16.msra.mxu0 %v551
    %715 = vmatprep.subr.bf16.mxu0 0
    %716 = vmatpush1.bf16.msra.mxu0 %v552
    %717 = vmatprep.subr.bf16.mxu0 0
    %718 = vmatpush1.bf16.msra.mxu0 %v553
    %719 = vmatprep.subr.bf16.mxu0 0
    %720 = vmatpush1.bf16.msra.mxu0 %v554
    %721 = vmatprep.subr.bf16.mxu0 0
    %722 = vmatpush1.bf16.msra.mxu0 %v555
    %723 = vmatprep.subr.bf16.mxu0 0
    %724 = vmatpush1.bf16.msra.mxu0 %v556
    %725 = vmatprep.subr.bf16.mxu0 0
    %726 = vmatpush1.bf16.msra.mxu0 %v557
    %727 = vmatprep.mubr.bf16.mxu0 %v257
    %728 = vmatmul.mubr.bf16.gmra.mrb[0].mxu0 %v256
    %v729 = vpop.f32.mrb[0].mxu0
    %v730 = vadd.f32 %v689, %v729
    %v731 = vpop.f32.mrb[0].mxu0
    %v732 = vpop.f32.mrb[0].mxu0
    %v733 = vadd.f32 %v692, %v732
    %v734 = vpop.f32.mrb[0].mxu0
    %735 = vdwg.mxu0
    %736 = vmatprep.subr.bf16.mxu0 0
    %737 = vmatpush1.bf16.msra.mxu0 %v558
    %738 = vmatprep.subr.bf16.mxu0 0
    %739 = vmatpush1.bf16.msra.mxu0 %v559
    %740 = vmatprep.subr.bf16.mxu0 0
    %741 = vmatpush1.bf16.msra.mxu0 %v560
    %742 = vmatprep.subr.bf16.mxu0 0
    %743 = vmatpush1.bf16.msra.mxu0 %v561
    %744 = vmatprep.subr.bf16.mxu0 0
    %745 = vmatpush1.bf16.msra.mxu0 %v562
    %746 = vmatprep.subr.bf16.mxu0 0
    %747 = vmatpush1.bf16.msra.mxu0 %v563
    %748 = vmatprep.subr.bf16.mxu0 0
    %749 = vmatpush1.bf16.msra.mxu0 %v564
    %750 = vmatprep.subr.bf16.mxu0 0
    %751 = vmatpush1.bf16.msra.mxu0 %v565
    %752 = vmatprep.subr.bf16.mxu0 0
    %753 = vmatpush1.bf16.msra.mxu0 %v566
    %754 = vmatprep.subr.bf16.mxu0 0
    %755 = vmatpush1.bf16.msra.mxu0 %v567
    %756 = vmatprep.subr.bf16.mxu0 0
    %757 = vmatpush1.bf16.msra.mxu0 %v568
    %758 = vmatprep.subr.bf16.mxu0 0
    %759 = vmatpush1.bf16.msra.mxu0 %v569
    %760 = vmatprep.subr.bf16.mxu0 0
    %761 = vmatpush1.bf16.msra.mxu0 %v570
    %762 = vmatprep.subr.bf16.mxu0 0
    %763 = vmatpush1.bf16.msra.mxu0 %v571
    %764 = vmatprep.subr.bf16.mxu0 0
    %765 = vmatpush1.bf16.msra.mxu0 %v572
    %766 = vmatprep.subr.bf16.mxu0 0
    %767 = vmatpush1.bf16.msra.mxu0 %v573
    %768 = vmatprep.mubr.bf16.mxu0 %v259
    %769 = vmatmul.mubr.bf16.gmra.mrb[0].mxu0 %v258
    %v770 = vpop.f32.mrb[0].mxu0
    %v771 = vadd.f32 %v730, %v770
    %v772 = vpop.f32.mrb[0].mxu0
    %v773 = vpop.f32.mrb[0].mxu0
    %v774 = vadd.f32 %v733, %v773
    %v775 = vpop.f32.mrb[0].mxu0
    %776 = vdwg.mxu0
    %777 = vmatprep.subr.bf16.mxu0 0
    %778 = vmatpush1.bf16.msra.mxu0 %v574
    %779 = vmatprep.subr.bf16.mxu0 0
    %780 = vmatpush1.bf16.msra.mxu0 %v575
    %781 = vmatprep.subr.bf16.mxu0 0
    %782 = vmatpush1.bf16.msra.mxu0 %v576
    %783 = vmatprep.subr.bf16.mxu0 0
    %784 = vmatpush1.bf16.msra.mxu0 %v577
    %785 = vmatprep.subr.bf16.mxu0 0
    %786 = vmatpush1.bf16.msra.mxu0 %v578
    %787 = vmatprep.subr.bf16.mxu0 0
    %788 = vmatpush1.bf16.msra.mxu0 %v579
    %789 = vmatprep.subr.bf16.mxu0 0
    %790 = vmatpush1.bf16.msra.mxu0 %v580
    %791 = vmatprep.subr.bf16.mxu0 0
    %792 = vmatpush1.bf16.msra.mxu0 %v581
    %793 = vmatprep.subr.bf16.mxu0 0
    %794 = vmatpush1.bf16.msra.mxu0 %v582
    %795 = vmatprep.subr.bf16.mxu0 0
    %796 = vmatpush1.bf16.msra.mxu0 %v583
    %797 = vmatprep.subr.bf16.mxu0 0
    %798 = vmatpush1.bf16.msra.mxu0 %v584
    %799 = vmatprep.subr.bf16.mxu0 0
    %800 = vmatpush1.bf16.msra.mxu0 %v585
    %801 = vmatprep.subr.bf16.mxu0 0
    %802 = vmatpush1.bf16.msra.mxu0 %v586
    %803 = vmatprep.subr.bf16.mxu0 0
    %804 = vmatpush1.bf16.msra.mxu0 %v587
    %805 = vmatprep.subr.bf16.mxu0 0
    %806 = vmatpush1.bf16.msra.mxu0 %v588
    %807 = vmatprep.subr.bf16.mxu0 0
    %808 = vmatpush1.bf16.msra.mxu0 %v589
    %809 = vmatprep.mubr.bf16.mxu0 %v261
    %810 = vmatmul.mubr.bf16.gmra.mrb[0].mxu0 %v260
    %v811 = vpop.f32.mrb[0].mxu0
    %v812 = vadd.f32 %v771, %v811
    %v813 = vpop.f32.mrb[0].mxu0
    %v814 = vpop.f32.mrb[0].mxu0
    %v815 = vadd.f32 %v774, %v814
    %v816 = vpop.f32.mrb[0].mxu0
    %817 = vdwg.mxu0
    %v818 = vadd.f32 %v92, %v812
    %v819 = vadd.f32 %v93, %v815
    %820 = vst [vmem:[#allocation2] sm:$0xff] %v818
    %821 = vst [vmem:[#allocation2 + $0x8] sm:$0xff] %v819
    // Predicated region
    $region50: #{tpu_custom_call.1} parent=1 // pred_check
      %p822 = pneg %p86
    $region51: #{tpu_custom_call.1} parent=1 // pred_check_branch
      %824 = sbr.rel (%p822) target = $region53
    $region52: #{tpu_custom_call.1} parent=1 // pred_region
      %v825 = vld [vmem:[#allocation2] sm:$0xff]
      %v826 = vld [vmem:[#allocation2 + $0x8] sm:$0xff]
      %v827 = vld [vmem:[%s2] sm:$0x1]
      %v829 = vlaneseq
      %v830 = vshrl.u32 %v829, 7
      %v831 = vsub.s32 0, %v830
      %v832 = vrot.slane %v827, %v831
      %v834 = vadd.f32 %v825, %v832
      %v835 = vadd.f32 %v826, %v832
      %v836 = vmax.f32 %v834, 0.0
      %v837 = vmax.f32 %v835, 0.0
      %v838 = vpack.c.bf16 %v837, %v836
      %v839 = vld [vmem:[#allocation8] sm:$0xf]
      %v840 = vld [vmem:[#allocation8 + $0x4] sm:$0xf]
      %v841 = vld [vmem:[#allocation8 + $0x8] sm:$0xf]
      %v842 = vld [vmem:[#allocation8 + $0xc] sm:$0xf]
      %v843 = vld [vmem:[#allocation8 + $0x10] sm:$0xf]
      %v844 = vld [vmem:[#allocation8 + $0x14] sm:$0xf]
      %v845 = vld [vmem:[#allocation8 + $0x18] sm:$0xf]
      %v846 = vld [vmem:[#allocation8 + $0x1c] sm:$0xf]
      %v847 = vld [vmem:[#allocation8 + $0x20] sm:$0xf]
      %v848 = vld [vmem:[#allocation8 + $0x24] sm:$0xf]
      %v849 = vld [vmem:[#allocation8 + $0x28] sm:$0xf]
      %v850 = vld [vmem:[#allocation8 + $0x2c] sm:$0xf]
      %v851 = vld [vmem:[#allocation8 + $0x30] sm:$0xf]
      %v852 = vld [vmem:[#allocation8 + $0x34] sm:$0xf]
      %v853 = vld [vmem:[#allocation8 + $0x38] sm:$0xf]
      %v854 = vld [vmem:[#allocation8 + $0x3c] sm:$0xf]
      %v855 = vld [vmem:[%s4] sm:$0x1]
      %v857 = vlaneseq
      %v858 = vshrl.u32 %v857, 7
      %v859 = vsub.s32 0, %v858
      %v860 = vrot.slane %v855, %v859
      %v878 = vunpack.c.l.b16 %v839
      %v879 = vunpack.c.l.b16 %v840
      %v880 = vunpack.c.l.b16 %v841
      %v881 = vunpack.c.l.b16 %v842
      %v882 = vunpack.c.l.b16 %v843
      %v883 = vunpack.c.l.b16 %v844
      %v884 = vunpack.c.l.b16 %v845
      %v885 = vunpack.c.l.b16 %v846
      %v886 = vunpack.c.l.b16 %v847
      %v887 = vunpack.c.l.b16 %v848
      %v888 = vunpack.c.l.b16 %v849
      %v889 = vunpack.c.l.b16 %v850
      %v890 = vunpack.c.l.b16 %v851
      %v891 = vunpack.c.l.b16 %v852
      %v892 = vunpack.c.l.b16 %v853
      %v893 = vunpack.c.l.b16 %v854
      %v894 = vpack.c.b16 %v879, %v878
      %v895 = vpack.c.b16 %v881, %v880
      %v896 = vpack.c.b16 %v883, %v882
      %v897 = vpack.c.b16 %v885, %v884
      %v898 = vpack.c.b16 %v887, %v886
      %v899 = vpack.c.b16 %v889, %v888
      %v900 = vpack.c.b16 %v891, %v890
      %v901 = vpack.c.b16 %v893, %v892
      %910 = vmatprep.subr.bf16.mxu0 0
      %911 = vmatpush1.bf16.msra.mxu0 %v894
      %912 = vmatprep.subr.bf16.mxu0 0
      %913 = vmatpush1.bf16.msra.mxu0 %v895
      %914 = vmatprep.subr.bf16.mxu0 0
      %915 = vmatpush1.bf16.msra.mxu0 %v896
      %916 = vmatprep.subr.bf16.mxu0 0
      %917 = vmatpush1.bf16.msra.mxu0 %v897
      %918 = vmatprep.subr.bf16.mxu0 0
      %919 = vmatpush1.bf16.msra.mxu0 %v898
      %920 = vmatprep.subr.bf16.mxu0 0
      %921 = vmatpush1.bf16.msra.mxu0 %v899
      %922 = vmatprep.subr.bf16.mxu0 0
      %923 = vmatpush1.bf16.msra.mxu0 %v900
      %924 = vmatprep.subr.bf16.mxu0 0
      %925 = vmatpush1.bf16.msra.mxu0 %v901
      %926 = vmatprep.subr.bf16.mxu0 0
      %927 = vmatpush1.bf16.msra.mxu0 0
      %928 = vmatprep.subr.bf16.mxu0 0
      %929 = vmatpush1.bf16.msra.mxu0 0
      %930 = vmatprep.subr.bf16.mxu0 0
      %931 = vmatpush1.bf16.msra.mxu0 0
      %932 = vmatprep.subr.bf16.mxu0 0
      %933 = vmatpush1.bf16.msra.mxu0 0
      %934 = vmatprep.subr.bf16.mxu0 0
      %935 = vmatpush1.bf16.msra.mxu0 0
      %936 = vmatprep.subr.bf16.mxu0 0
      %937 = vmatpush1.bf16.msra.mxu0 0
      %938 = vmatprep.subr.bf16.mxu0 0
      %939 = vmatpush1.bf16.msra.mxu0 0
      %940 = vmatprep.subr.bf16.mxu0 0
      %941 = vmatpush1.bf16.msra.mxu0 0
      %942 = vmatprep.mubr.bf16.mxu0 0
      %943 = vmatmul.mubr.bf16.gmra.mrb[0].mxu0 %v838
      %v944 = vpop.f32.mrb[0].mxu0
      %v945 = vadd.f32 %v860, %v944
      %v946 = vpop.f32.mrb[0].mxu0
      %v947 = vpop.f32.mrb[0].mxu0
      %v948 = vadd.f32 %v860, %v947
      %v949 = vpop.f32.mrb[0].mxu0
      %950 = vdwg.mxu0
      %951 = vst [vmem:[#allocation11] sm:$0xff] %v945
      %952 = vst [vmem:[#allocation11 + $0x8] sm:$0xff] %v948
      %v953 = vpack.c.bf16 %v948, %v945
      %v954 = vld [vmem:[#allocation9] sm:$0xf]
      %v955 = vld [vmem:[#allocation9 + $0x4] sm:$0xf]
      %v956 = vld [vmem:[#allocation9 + $0x8] sm:$0xf]
      %v957 = vld [vmem:[#allocation9 + $0xc] sm:$0xf]
      %v958 = vld [vmem:[#allocation9 + $0x10] sm:$0xf]
      %v959 = vld [vmem:[#allocation9 + $0x14] sm:$0xf]
      %v960 = vld [vmem:[#allocation9 + $0x18] sm:$0xf]
      %v961 = vld [vmem:[#allocation9 + $0x1c] sm:$0xf]
      %v962 = vld [vmem:[#allocation9 + $0x20] sm:$0xf]
      %v963 = vld [vmem:[#allocation9 + $0x24] sm:$0xf]
      %v964 = vld [vmem:[#allocation9 + $0x28] sm:$0xf]
      %v965 = vld [vmem:[#allocation9 + $0x2c] sm:$0xf]
      %v966 = vld [vmem:[#allocation9 + $0x30] sm:$0xf]
      %v967 = vld [vmem:[#allocation9 + $0x34] sm:$0xf]
      %v968 = vld [vmem:[#allocation9 + $0x38] sm:$0xf]
      %v969 = vld [vmem:[#allocation9 + $0x3c] sm:$0xf]
      %v970 = vld [vmem:[%s6] sm:$0x1]
      %v972 = vlaneseq
      %v973 = vshrl.u32 %v972, 7
      %v974 = vsub.s32 0, %v973
      %v975 = vrot.slane %v970, %v974
      %v993 = vunpack.c.l.b16 %v954
      %v994 = vunpack.c.l.b16 %v955
      %v995 = vunpack.c.l.b16 %v956
      %v996 = vunpack.c.l.b16 %v957
      %v997 = vunpack.c.l.b16 %v958
      %v998 = vunpack.c.l.b16 %v959
      %v999 = vunpack.c.l.b16 %v960
      %v1000 = vunpack.c.l.b16 %v961
      %v1001 = vunpack.c.l.b16 %v962
      %v1002 = vunpack.c.l.b16 %v963
      %v1003 = vunpack.c.l.b16 %v964
      %v1004 = vunpack.c.l.b16 %v965
      %v1005 = vunpack.c.l.b16 %v966
      %v1006 = vunpack.c.l.b16 %v967
      %v1007 = vunpack.c.l.b16 %v968
      %v1008 = vunpack.c.l.b16 %v969
      %v1009 = vpack.c.b16 %v994, %v993
      %v1010 = vpack.c.b16 %v996, %v995
      %v1011 = vpack.c.b16 %v998, %v997
      %v1012 = vpack.c.b16 %v1000, %v999
      %v1013 = vpack.c.b16 %v1002, %v1001
      %v1014 = vpack.c.b16 %v1004, %v1003
      %v1015 = vpack.c.b16 %v1006, %v1005
      %v1016 = vpack.c.b16 %v1008, %v1007
      %1025 = vmatprep.subr.bf16.mxu0 0
      %1026 = vmatpush1.bf16.msra.mxu0 %v1009
      %1027 = vmatprep.subr.bf16.mxu0 0
      %1028 = vmatpush1.bf16.msra.mxu0 %v1010
      %1029 = vmatprep.subr.bf16.mxu0 0
      %1030 = vmatpush1.bf16.msra.mxu0 %v1011
      %1031 = vmatprep.subr.bf16.mxu0 0
      %1032 = vmatpush1.bf16.msra.mxu0 %v1012
      %1033 = vmatprep.subr.bf16.mxu0 0
      %1034 = vmatpush1.bf16.msra.mxu0 %v1013
      %1035 = vmatprep.subr.bf16.mxu0 0
      %1036 = vmatpush1.bf16.msra.mxu0 %v1014
      %1037 = vmatprep.subr.bf16.mxu0 0
      %1038 = vmatpush1.bf16.msra.mxu0 %v1015
      %1039 = vmatprep.subr.bf16.mxu0 0
      %1040 = vmatpush1.bf16.msra.mxu0 %v1016
      %1041 = vmatprep.subr.bf16.mxu0 0
      %1042 = vmatpush1.bf16.msra.mxu0 0
      %1043 = vmatprep.subr.bf16.mxu0 0
      %1044 = vmatpush1.bf16.msra.mxu0 0
      %1045 = vmatprep.subr.bf16.mxu0 0
      %1046 = vmatpush1.bf16.msra.mxu0 0
      %1047 = vmatprep.subr.bf16.mxu0 0
      %1048 = vmatpush1.bf16.msra.mxu0 0
      %1049 = vmatprep.subr.bf16.mxu0 0
      %1050 = vmatpush1.bf16.msra.mxu0 0
      %1051 = vmatprep.subr.bf16.mxu0 0
      %1052 = vmatpush1.bf16.msra.mxu0 0
      %1053 = vmatprep.subr.bf16.mxu0 0
      %1054 = vmatpush1.bf16.msra.mxu0 0
      %1055 = vmatprep.subr.bf16.mxu0 0
      %1056 = vmatpush1.bf16.msra.mxu0 0
      %1057 = vmatprep.mubr.bf16.mxu0 0
      %1058 = vmatmul.mubr.bf16.gmra.mrb[0].mxu0 %v953
      %v1059 = vpop.f32.mrb[0].mxu0
      %v1060 = vadd.f32 %v975, %v1059
      %v1061 = vpop.f32.mrb[0].mxu0
      %v1062 = vpop.f32.mrb[0].mxu0
      %v1063 = vadd.f32 %v975, %v1062
      %v1064 = vpop.f32.mrb[0].mxu0
      %1065 = vdwg.mxu0
      %1066 = vmax.xlane.f32.xlu0 %v1060
      %v1067 = vpop.xlane.xlu0 %1066
      %1068 = vmax.xlane.f32.xlu0 %v1063
      %v1069 = vpop.xlane.xlu0 %1068
      %v1070 = vsub.f32 %v1060, %v1067
      %v1071 = vsub.f32 %v1063, %v1069
      %v1072 = vmul.f32 %v1070, 1.442695
      %v1073 = vpow.pop %v1072
      %v1074 = vmul.f32 %v1071, 1.442695
      %v1075 = vpow.pop %v1074
      %1076 = vadd.xlane.f32.xlu0 %v1073
      %v1077 = vpop.xlane.xlu0 %1076
      %1078 = vadd.xlane.f32.xlu0 %v1075
      %v1079 = vpop.xlane.xlu0 %1078
      %v1080 = vrcp.pop %v1077
      %v1081 = vrcp.pop %v1079
      %v1082 = vmul.f32 %v1073, %v1080
      %v1083 = vmul.f32 %v1075, %v1081
      %1084 = vst [vmem:[#allocation12] sm:$0xff] %v1082
      %1085 = vst [vmem:[#allocation12 + $0x8] sm:$0xff] %v1083
    $region53: #{tpu_custom_call.1} parent=1 // pred_fallthru
      _
    // Predicated region
    $region54: #{tpu_custom_call.1} parent=1 // pred_check
      _
    $region55: #{tpu_custom_call.1} parent=1 // pred_check_branch
      %1087 = sbr.rel (0) target = $region57
    $region56: #{tpu_custom_call.1} parent=1 // pred_region
      %s1089 = ssub.s32 256, 256
      %1090 = vsyncadd [#allocation5], %s1089
      %s1091 = sshll.u32 [#allocation11], 4
      %s1092 = int_to_ptr.vmem [resolvable:$true] %s1091
      %1097 = dma.vmem_to_hbm [thread:$0]  %s1092, 256, %s7, [#allocation5], 128, 128, 8
    $region57: #{tpu_custom_call.1} parent=1 // pred_fallthru
      _
    // Predicated region
    $region58: #{tpu_custom_call.1} parent=1 // pred_check
      _
    $region59: #{tpu_custom_call.1} parent=1 // pred_check_branch
      %1099 = sbr.rel (0) target = $region61
    $region60: #{tpu_custom_call.1} parent=1 // pred_region
      %s1101 = ssub.s32 256, 256
      %1102 = vsyncadd [#allocation13], %s1101
      %s1103 = sshll.u32 [#allocation12], 4
      %s1104 = int_to_ptr.vmem [resolvable:$true] %s1103
      %1109 = dma.vmem_to_hbm [thread:$0]  %s1104, 256, %s8, [#allocation13], 128, 128, 8
    $region61: #{tpu_custom_call.1} parent=1 // pred_fallthru
      _
    // Predicated region
    $region62: #{tpu_custom_call.1} parent=1 // pred_check
      _
    $region63: #{tpu_custom_call.1} parent=1 // pred_check_branch
      %1111 = sbr.rel (0) target = $region65
    $region64: #{tpu_custom_call.1} parent=1 // pred_region
      %1112 = dma.done [#allocation5], 256
    $region65: #{tpu_custom_call.1} parent=1 // pred_fallthru
      _
    // Predicated region
    $region66: #{tpu_custom_call.1} parent=1 // pred_check
      _
    $region67: #{tpu_custom_call.1} parent=1 // pred_check_branch
      %1114 = sbr.rel (0) target = $region69
    $region68: #{tpu_custom_call.1} parent=1 // pred_region
      %1115 = dma.done [#allocation13], 256
    $region69: #{tpu_custom_call.1} parent=1 // pred_fallthru
      _
    %1116 = vsyncpa [#allocation4], 1
    %1117 = vsyncpa [#allocation7], 1
    %1118 = vsyncpa [#allocation10], 1
    %1119 = vsyncpa [#allocation5], 1
    %1120 = vsyncpa [#allocation13], 1

</llo_original>
